<compile_context>
chip_gen: v6e
topology: v6e:2x2x1
jax: 0.10.0
libtpu: 0.0.40
codegen_flags: <defaults>
</compile_context>

<pallas_src>
import jax
import jax.numpy as jnp
from jax.experimental import pallas as pl
from jax.experimental.pallas import tpu as pltpu


def _cls_head_kernel(x_ref, w1_ref, b1_ref, w2_ref, b2_ref, o_ref):
    # x_ref: (bm, D_in)   w1_ref: (D_in, D_hid)   b1_ref: (1, D_hid) f32
    # w2_ref: (D_hid, Cp) b2_ref: (1, Cp) f32     o_ref: (bm, Cp)
    # Dropout (p=pooler_dropout) is identity at inference time.
    # TODO(synk): training-mode dropout masking is intentionally not implemented.
    x = x_ref[...].astype(w1_ref.dtype)              # feed the MXU bf16 (or f32)
    h = jnp.dot(x, w1_ref[...], preferred_element_type=jnp.float32)
    h = jnp.tanh(h + b1_ref[...])                    # bias add + tanh in f32
    out = jnp.dot(h.astype(w2_ref.dtype), w2_ref[...],
                  preferred_element_type=jnp.float32) + b2_ref[...]
    o_ref[...] = out.astype(o_ref.dtype)


def _round_up(n, m):
    return ((n + m - 1) // m) * m


def bart_classification_head(x, w1, b1, w2, b2, *, block_m=None,
                             compute_dtype=jnp.bfloat16, force_pallas=False):
    """x: [B, D_in]; w1: [D_in, D_hid]; b1: [D_hid]; w2: [D_hid, C]; b2: [C]."""
    B, D_in = x.shape
    D_hid = w1.shape[1]
    C = w2.shape[1]
    out_dtype = x.dtype

    flops = 2 * B * D_in * D_hid + 2 * B * D_hid * C

    # Tiny-call dispatch: below ~1 MFLOP the pallas_call launch + DMA setup
    # dominates; let XLA fuse the two matmuls instead.
    if not force_pallas and flops < (1 << 21):
        h = jnp.tanh(jnp.dot(x, w1) + b1)
        return (jnp.dot(h, w2) + b2).astype(out_dtype)

    # Sublane multiple for the batch (second-minor) axis of x tiles.
    sub = 8 * (4 // max(1, x.dtype.itemsize))
    if block_m is None:
        if B >= 512:
            block_m = 256                                  # MXU-aligned cap
        elif B >= 4 * sub:
            block_m = _round_up(pl.cdiv(B, 2), sub)        # >=2 tiles: both v7x TCs
        else:
            block_m = _round_up(B, sub)
    else:
        block_m = _round_up(block_m, sub)

    B_pad = _round_up(B, block_m)
    C_pad = _round_up(C, 128)          # lane-dense output stores (no vst.msk)

    x_p = x if B_pad == B else jnp.pad(x, ((0, B_pad - B), (0, 0)))
    w1_c = w1.astype(compute_dtype)
    w2_c = w2.astype(compute_dtype)
    b2_p = b2
    if C_pad != C:
        w2_c = jnp.pad(w2_c, ((0, 0), (0, C_pad - C)))
        b2_p = jnp.pad(b2, (0, C_pad - C))
    b1_2d = b1.astype(jnp.float32).reshape(1, D_hid)
    b2_2d = b2_p.astype(jnp.float32).reshape(1, C_pad)

    grid = (B_pad // block_m,)

    # VMEM budget from the actual tile footprint (x/out double-buffered,
    # weights ideally single-buffered; 2x assumed for safety) + f32 scratch.
    w_itm = jnp.dtype(compute_dtype).itemsize
    x_tile = block_m * D_in * x.dtype.itemsize
    o_tile = block_m * C_pad * jnp.dtype(out_dtype).itemsize
    w_bytes = (D_in * D_hid + D_hid * C_pad) * w_itm + (D_hid + C_pad) * 4
    scratch = block_m * (D_hid + C_pad) * 4
    footprint = 2 * (x_tile + o_tile) + 2 * w_bytes + scratch
    vmem_limit = int(min(64 * 2**20, max(24 * 2**20, 3 * footprint)))

    cost = pl.CostEstimate(
        flops=flops,
        transcendentals=B * D_hid,
        bytes_accessed=(B * D_in * x.dtype.itemsize
                        + (D_in * D_hid + D_hid * C_pad) * w_itm
                        + (D_hid + C_pad) * 4
                        + B_pad * C_pad * jnp.dtype(out_dtype).itemsize),
    )

    def _build_and_call(single_buffer_weights):
        wkw = {"pipeline_mode": pl.Buffered(1)} if single_buffer_weights else {}
        in_specs = [
            pl.BlockSpec((block_m, D_in), lambda i: (i, 0)),
            pl.BlockSpec((D_in, D_hid), lambda i: (0, 0), **wkw),
            pl.BlockSpec((1, D_hid), lambda i: (0, 0), **wkw),
            pl.BlockSpec((D_hid, C_pad), lambda i: (0, 0), **wkw),
            pl.BlockSpec((1, C_pad), lambda i: (0, 0), **wkw),
        ]
        return pl.pallas_call(
            _cls_head_kernel,
            out_shape=jax.ShapeDtypeStruct((B_pad, C_pad), out_dtype),
            grid_spec=pltpu.PrefetchScalarGridSpec(
                num_scalar_prefetch=0,
                grid=grid,
                in_specs=in_specs,
                out_specs=pl.BlockSpec((block_m, C_pad), lambda i: (i, 0)),
            ),
            compiler_params=pltpu.CompilerParams(
                dimension_semantics=("parallel",),
                vmem_limit_bytes=vmem_limit),
            cost_estimate=cost,
        )(x_p, w1_c, b1_2d, w2_c, b2_2d)

    try:
        out = _build_and_call(True)
    except Exception:
        # pl.Buffered(1) not supported by this jax version -> default buffering.
        out = _build_and_call(False)

    return out[:B, :C]


if __name__ == "__main__":
    key = jax.random.PRNGKey(0)
    kx, kw1, kb1, kw2, kb2, kx2 = jax.random.split(key, 6)

    # --- Case 1: tiny module-like shapes, exact f32 compute path -------------
    B, D_in, D_hid, C = 8, 32, 32, 8
    x = jax.random.normal(kx, (B, D_in), dtype=jnp.float32)
    w1 = jax.random.normal(kw1, (D_in, D_hid), dtype=jnp.float32) * 0.05
    b1 = jax.random.normal(kb1, (D_hid,), dtype=jnp.float32) * 0.05
    w2 = jax.random.normal(kw2, (D_hid, C), dtype=jnp.float32) * 0.05
    b2 = jax.random.normal(kb2, (C,), dtype=jnp.float32) * 0.05

    out = bart_classification_head(x, w1, b1, w2, b2,
                                   compute_dtype=jnp.float32, force_pallas=True)
    out = jax.block_until_ready(out)
    ref = jnp.tanh(x @ w1 + b1) @ w2 + b2
    assert out.shape == (B, C)
    assert jnp.allclose(out, ref, atol=1e-5, rtol=1e-5)

    # --- Case 2: ragged batch, tiled grid, lane-padded C, bf16 MXU path ------
    B2, D_in2, D_hid2, C2 = 72, 256, 128, 3
    x2 = jax.random.normal(kx2, (B2, D_in2), dtype=jnp.float32)
    w1b = jax.random.normal(kw1, (D_in2, D_hid2), dtype=jnp.float32) * 0.05
    b1b = jax.random.normal(kb1, (D_hid2,), dtype=jnp.float32) * 0.05
    w2b = jax.random.normal(kw2, (D_hid2, C2), dtype=jnp.float32) * 0.05
    b2b = jax.random.normal(kb2, (C2,), dtype=jnp.float32) * 0.05

    out2 = bart_classification_head(x2, w1b, b1b, w2b, b2b, force_pallas=True)
    out2 = jax.block_until_ready(out2)
    ref2 = jnp.tanh(x2 @ w1b + b1b) @ w2b + b2b
    assert out2.shape == (B2, C2)
    assert jnp.allclose(out2, ref2, atol=3e-2, rtol=3e-2)  # bf16 weights/MXU

    print("KERNEL_OK")
</pallas_src>

<mosaic_0001>
module attributes {stable_mosaic.version = 11 : i64} {
  func.func @_cls_head_kernel(%arg0: i32, %arg1: memref<8x32xf32, #tpu.memory_space<vmem>>, %arg2: memref<32x32xf32, #tpu.memory_space<vmem>>, %arg3: memref<1x32xf32, #tpu.memory_space<vmem>>, %arg4: memref<32x128xf32, #tpu.memory_space<vmem>>, %arg5: memref<1x128xf32, #tpu.memory_space<vmem>>, %arg6: memref<8x128xf32, #tpu.memory_space<vmem>>) attributes {dimension_semantics = [#tpu.dimension_semantics<parallel>], iteration_bounds = array<i64: 1>, scalar_prefetch = 0 : i64, scratch_operands = 0 : i64, tpu.core_type = #tpu.core_type<tc>, window_params = [{transform_indices = @transform_0, window_bounds = array<i64: 8, 32>}, {pipeline_mode = #tpu.pipeline_mode<synchronous>, transform_indices = @transform_1, window_bounds = array<i64: 32, 32>}, {pipeline_mode = #tpu.pipeline_mode<synchronous>, transform_indices = @transform_2, window_bounds = array<i64: 1, 32>}, {pipeline_mode = #tpu.pipeline_mode<synchronous>, transform_indices = @transform_3, window_bounds = array<i64: 32, 128>}, {pipeline_mode = #tpu.pipeline_mode<synchronous>, transform_indices = @transform_4, window_bounds = array<i64: 1, 128>}, {transform_indices = @transform_5, window_bounds = array<i64: 8, 128>}]} {
    %c0 = arith.constant 0 : index
    %c0_0 = arith.constant 0 : index
    %0 = vector.load %arg1[%c0, %c0_0] : memref<8x32xf32, #tpu.memory_space<vmem>>, vector<8x32xf32>
    %c0_1 = arith.constant 0 : index
    %c0_2 = arith.constant 0 : index
    %1 = vector.load %arg2[%c0_1, %c0_2] : memref<32x32xf32, #tpu.memory_space<vmem>>, vector<32x32xf32>
    %cst = arith.constant dense<0.000000e+00> : vector<8x32xf32>
    %2 = tpu.matmul %0, %1, %cst {dimension_numbers = #tpu.dot_dimension_numbers<[1], [0], [0], [1], [0, 0, 1, 1], [], []>} : vector<8x32xf32>, vector<32x32xf32>, vector<8x32xf32> -> vector<8x32xf32>
    %c0_3 = arith.constant 0 : index
    %c0_4 = arith.constant 0 : index
    %3 = vector.load %arg3[%c0_3, %c0_4] : memref<1x32xf32, #tpu.memory_space<vmem>>, vector<1x32xf32>
    %4 = vector.broadcast %3 : vector<1x32xf32> to vector<8x32xf32>
    %5 = arith.addf %2, %4 : vector<8x32xf32>
    %6 = math.tanh %5 : vector<8x32xf32>
    %c0_5 = arith.constant 0 : index
    %c0_6 = arith.constant 0 : index
    %7 = vector.load %arg4[%c0_5, %c0_6] : memref<32x128xf32, #tpu.memory_space<vmem>>, vector<32x128xf32>
    %cst_7 = arith.constant dense<0.000000e+00> : vector<8x128xf32>
    %8 = tpu.matmul %6, %7, %cst_7 {dimension_numbers = #tpu.dot_dimension_numbers<[1], [0], [0], [1], [0, 0, 1, 1], [], []>} : vector<8x32xf32>, vector<32x128xf32>, vector<8x128xf32> -> vector<8x128xf32>
    %c0_8 = arith.constant 0 : index
    %c0_9 = arith.constant 0 : index
    %9 = vector.load %arg5[%c0_8, %c0_9] : memref<1x128xf32, #tpu.memory_space<vmem>>, vector<1x128xf32>
    %10 = vector.broadcast %9 : vector<1x128xf32> to vector<8x128xf32>
    %11 = arith.addf %8, %10 : vector<8x128xf32>
    %c0_10 = arith.constant 0 : index
    %c0_11 = arith.constant 0 : index
    %12 = vector.load %arg6[%c0_10, %c0_11] : memref<8x128xf32, #tpu.memory_space<vmem>>, vector<8x128xf32>
    tpu.vector_store %arg6[%c0_10, %c0_11], %11 {strides = array<i32>} : memref<8x128xf32, #tpu.memory_space<vmem>>, vector<8x128xf32>,
    return
  }
  func.func @transform_0(%arg0: i32) -> (i32, i32) {
    %c0_i32 = arith.constant 0 : i32
    %c0_i32_0 = arith.constant 0 : i32
    return %arg0, %c0_i32 : i32, i32
  }
  func.func @transform_1(%arg0: i32) -> (i32, i32) {
    %c0_i32 = arith.constant 0 : i32
    %c0_i32_0 = arith.constant 0 : i32
    %c0_i32_1 = arith.constant 0 : i32
    return %c0_i32, %c0_i32_0 : i32, i32
  }
  func.func @transform_2(%arg0: i32) -> (i32, i32) {
    %c0_i32 = arith.constant 0 : i32
    %c0_i32_0 = arith.constant 0 : i32
    %c0_i32_1 = arith.constant 0 : i32
    return %c0_i32, %c0_i32_0 : i32, i32
  }
  func.func @transform_3(%arg0: i32) -> (i32, i32) {
    %c0_i32 = arith.constant 0 : i32
    %c0_i32_0 = arith.constant 0 : i32
    %c0_i32_1 = arith.constant 0 : i32
    return %c0_i32, %c0_i32_0 : i32, i32
  }
  func.func @transform_4(%arg0: i32) -> (i32, i32) {
    %c0_i32 = arith.constant 0 : i32
    %c0_i32_0 = arith.constant 0 : i32
    %c0_i32_1 = arith.constant 0 : i32
    return %c0_i32, %c0_i32_0 : i32, i32
  }
  func.func @transform_5(%arg0: i32) -> (i32, i32) {
    %c0_i32 = arith.constant 0 : i32
    %c0_i32_0 = arith.constant 0 : i32
    return %arg0, %c0_i32 : i32, i32
  }
}

module attributes {stable_mosaic.version = 11 : i64} {
  func.func @_cls_head_kernel(%arg0: i32, %arg1: memref<8x32xf32, #tpu.memory_space<vmem>>, %arg2: memref<32x32xf32, #tpu.memory_space<vmem>>, %arg3: memref<1x32xf32, #tpu.memory_space<vmem>>, %arg4: memref<32x128xf32, #tpu.memory_space<vmem>>, %arg5: memref<1x128xf32, #tpu.memory_space<vmem>>, %arg6: memref<8x128xf32, #tpu.memory_space<vmem>>) attributes {dimension_semantics = [#tpu.dimension_semantics<parallel>], iteration_bounds = array<i64: 1>, scalar_prefetch = 0 : i64, scratch_operands = 0 : i64, tpu.core_type = #tpu.core_type<tc>, window_params = [{transform_indices = @transform_0, window_bounds = array<i64: 8, 32>}, {pipeline_mode = #tpu.pipeline_mode<synchronous>, transform_indices = @transform_1, window_bounds = array<i64: 32, 32>}, {pipeline_mode = #tpu.pipeline_mode<synchronous>, transform_indices = @transform_2, window_bounds = array<i64: 1, 32>}, {pipeline_mode = #tpu.pipeline_mode<synchronous>, transform_indices = @transform_3, window_bounds = array<i64: 32, 128>}, {pipeline_mode = #tpu.pipeline_mode<synchronous>, transform_indices = @transform_4, window_bounds = array<i64: 1, 128>}, {transform_indices = @transform_5, window_bounds = array<i64: 8, 128>}]} {
    %c0 = arith.constant 0 : index
    %c0_0 = arith.constant 0 : index
    %0 = vector.load %arg1[%c0, %c0_0] : memref<8x32xf32, #tpu.memory_space<vmem>>, vector<8x32xf32>
    %c0_1 = arith.constant 0 : index
    %c0_2 = arith.constant 0 : index
    %1 = vector.load %arg2[%c0_1, %c0_2] : memref<32x32xf32, #tpu.memory_space<vmem>>, vector<32x32xf32>
    %cst = arith.constant dense<0.000000e+00> : vector<8x32xf32>
    %2 = tpu.matmul %0, %1, %cst {dimension_numbers = #tpu.dot_dimension_numbers<[1], [0], [0], [1], [0, 0, 1, 1], [], []>} : vector<8x32xf32>, vector<32x32xf32>, vector<8x32xf32> -> vector<8x32xf32>
    %c0_3 = arith.constant 0 : index
    %c0_4 = arith.constant 0 : index
    %3 = vector.load %arg3[%c0_3, %c0_4] : memref<1x32xf32, #tpu.memory_space<vmem>>, vector<1x32xf32>
    %4 = vector.broadcast %3 : vector<1x32xf32> to vector<8x32xf32>
    %5 = arith.addf %2, %4 : vector<8x32xf32>
    %6 = math.tanh %5 : vector<8x32xf32>
    %c0_5 = arith.constant 0 : index
    %c0_6 = arith.constant 0 : index
    %7 = vector.load %arg4[%c0_5, %c0_6] : memref<32x128xf32, #tpu.memory_space<vmem>>, vector<32x128xf32>
    %cst_7 = arith.constant dense<0.000000e+00> : vector<8x128xf32>
    %8 = tpu.matmul %6, %7, %cst_7 {dimension_numbers = #tpu.dot_dimension_numbers<[1], [0], [0], [1], [0, 0, 1, 1], [], []>} : vector<8x32xf32>, vector<32x128xf32>, vector<8x128xf32> -> vector<8x128xf32>
    %c0_8 = arith.constant 0 : index
    %c0_9 = arith.constant 0 : index
    %9 = vector.load %arg5[%c0_8, %c0_9] : memref<1x128xf32, #tpu.memory_space<vmem>>, vector<1x128xf32>
    %10 = vector.broadcast %9 : vector<1x128xf32> to vector<8x128xf32>
    %11 = arith.addf %8, %10 : vector<8x128xf32>
    %c0_10 = arith.constant 0 : index
    %c0_11 = arith.constant 0 : index
    %12 = vector.load %arg6[%c0_10, %c0_11] : memref<8x128xf32, #tpu.memory_space<vmem>>, vector<8x128xf32>
    tpu.vector_store %arg6[%c0_10, %c0_11], %11 {strides = array<i32>} : memref<8x128xf32, #tpu.memory_space<vmem>>, vector<8x128xf32>,
    return
  }
  func.func @transform_0(%arg0: i32) -> (i32, i32) {
    %c0_i32 = arith.constant 0 : i32
    %c0_i32_0 = arith.constant 0 : i32
    return %arg0, %c0_i32 : i32, i32
  }
  func.func @transform_1(%arg0: i32) -> (i32, i32) {
    %c0_i32 = arith.constant 0 : i32
    %c0_i32_0 = arith.constant 0 : i32
    %c0_i32_1 = arith.constant 0 : i32
    return %c0_i32, %c0_i32_0 : i32, i32
  }
  func.func @transform_2(%arg0: i32) -> (i32, i32) {
    %c0_i32 = arith.constant 0 : i32
    %c0_i32_0 = arith.constant 0 : i32
    %c0_i32_1 = arith.constant 0 : i32
    return %c0_i32, %c0_i32_0 : i32, i32
  }
  func.func @transform_3(%arg0: i32) -> (i32, i32) {
    %c0_i32 = arith.constant 0 : i32
    %c0_i32_0 = arith.constant 0 : i32
    %c0_i32_1 = arith.constant 0 : i32
    return %c0_i32, %c0_i32_0 : i32, i32
  }
  func.func @transform_4(%arg0: i32) -> (i32, i32) {
    %c0_i32 = arith.constant 0 : i32
    %c0_i32_0 = arith.constant 0 : i32
    %c0_i32_1 = arith.constant 0 : i32
    return %c0_i32, %c0_i32_0 : i32, i32
  }
  func.func @transform_5(%arg0: i32) -> (i32, i32) {
    %c0_i32 = arith.constant 0 : i32
    %c0_i32_0 = arith.constant 0 : i32
    return %arg0, %c0_i32 : i32, i32
  }
}

</mosaic_0001>

<llo_original>
// kernel: tpu_custom_call.1
$region0: #{tpu_custom_call.1}
  #allocation0 [shape = 'u32[]', space=smem, size = 0x4, offset = 0x4, fixed_abs, tag = 'smem constant byte address 0x4 - core index']
  #allocation1 [shape = 'u32[144,128]{1,0:T(1,128)}', space=vmem, size = 0x12000, scoped, tag = 'internal scratch']
  %s0 = inlined_call_operand.hbm [shape: f32[8,32], index: 0, kind: input, shape index: {}]
  %s1 = inlined_call_operand.hbm [shape: f32[32,32], index: 1, kind: input, shape index: {}]
  %s2 = inlined_call_operand.vmem [shape: f32[1,32], index: 2, kind: input, shape index: {}]
  %s3 = inlined_call_operand.hbm [shape: f32[32,128], index: 3, kind: input, shape index: {}]
  %s4 = inlined_call_operand.vmem [shape: f32[1,128], index: 4, kind: input, shape index: {}]
  %s5 = inlined_call_operand.hbm [shape: f32[8,128], index: 5, kind: output, shape index: {}]
  %s6 = sld [smem:[#allocation0]]
  $region42: #{tpu_custom_call.1} parent=0
    _
  %s8 = ssub.s32 1, %s6
  %s9 = scalar_select 0, %s8, %s6
  $region1: #{tpu_custom_call.1} parent=0
    #allocation2 [shape = 'u8[4096]{0}', space=vmem, size = 0x1000, scoped, tag = 'input window, operand 0, single buffered']
    #allocation3 [shape = 's32[1]{0}', space=sflag, size = 0x4, scoped, tag = 'scoped memory for tpu_custom_call.1']
    #allocation4 [shape = 's32[1]{0}', space=sflag, size = 0x4, scoped, tag = 'scoped memory for tpu_custom_call.1']
    #allocation5 [shape = 'u8[16384]{0}', space=vmem, size = 0x4000, scoped, tag = 'input window, operand 1, single buffered']
    #allocation6 [shape = 's32[1]{0}', space=sflag, size = 0x4, scoped, tag = 'scoped memory for tpu_custom_call.1']
    #allocation7 [shape = 'u8[16384]{0}', space=vmem, size = 0x4000, scoped, tag = 'input window, operand 3, single buffered']
    #allocation8 [shape = 'u8[4096]{0}', space=vmem, size = 0x1000, scoped, tag = 'output window, operand 0, single buffered']
    %10 = vsyncpa [#allocation3], 0
    %11 = vsyncpa [#allocation6], 0
    %12 = vsyncpa [#allocation4], 0
    // Predicated region
    $region2: #{tpu_custom_call.1} parent=1 // pred_check
      _
    $region3: #{tpu_custom_call.1} parent=1 // pred_check_branch
      %14 = sbr.rel (0) target = $region5
    $region4: #{tpu_custom_call.1} parent=1 // pred_region
      %s16 = ssub.s32 128, 128
      %17 = vsyncadd [#allocation3], %s16
      %s19 = sshll.u32 [#allocation2], 4
      %s20 = int_to_ptr.vmem [resolvable:$true] %s19
      %22 = dma.hbm_to_vmem [thread:$0]  %s0, 128, %s20, [#allocation3]
    $region5: #{tpu_custom_call.1} parent=1 // pred_fallthru
      _
    // Predicated region
    $region6: #{tpu_custom_call.1} parent=1 // pred_check
      _
    $region7: #{tpu_custom_call.1} parent=1 // pred_check_branch
      %24 = sbr.rel (0) target = $region9
    $region8: #{tpu_custom_call.1} parent=1 // pred_region
      %s26 = ssub.s32 512, 512
      %27 = vsyncadd [#allocation6], %s26
      %s28 = sshll.u32 [#allocation5], 4
      %s29 = int_to_ptr.vmem [resolvable:$true] %s28
      %34 = dma.hbm_to_vmem [thread:$0]  %s1, 512, %s29, [#allocation6], 128, 128, 8
    $region9: #{tpu_custom_call.1} parent=1 // pred_fallthru
      _
    // Predicated region
    $region10: #{tpu_custom_call.1} parent=1 // pred_check
      _
    $region11: #{tpu_custom_call.1} parent=1 // pred_check_branch
      %36 = sbr.rel (0) target = $region13
    $region12: #{tpu_custom_call.1} parent=1 // pred_region
      _
    $region13: #{tpu_custom_call.1} parent=1 // pred_fallthru
      _
    // Predicated region
    $region14: #{tpu_custom_call.1} parent=1 // pred_check
      _
    $region15: #{tpu_custom_call.1} parent=1 // pred_check_branch
      %38 = sbr.rel (0) target = $region17
    $region16: #{tpu_custom_call.1} parent=1 // pred_region
      %s40 = ssub.s32 512, 512
      %41 = vsyncadd [#allocation6], %s40
      %s42 = sshll.u32 [#allocation7], 4
      %s43 = int_to_ptr.vmem [resolvable:$true] %s42
      %48 = dma.hbm_to_vmem [thread:$0]  %s3, 512, %s43, [#allocation6], 128, 128, 8
    $region17: #{tpu_custom_call.1} parent=1 // pred_fallthru
      _
    // Predicated region
    $region18: #{tpu_custom_call.1} parent=1 // pred_check
      _
    $region19: #{tpu_custom_call.1} parent=1 // pred_check_branch
      %50 = sbr.rel (0) target = $region21
    $region20: #{tpu_custom_call.1} parent=1 // pred_region
      _
    $region21: #{tpu_custom_call.1} parent=1 // pred_fallthru
      _
    // Predicated region
    $region22: #{tpu_custom_call.1} parent=1 // pred_check
      _
    $region23: #{tpu_custom_call.1} parent=1 // pred_check_branch
      %52 = sbr.rel (0) target = $region25
    $region24: #{tpu_custom_call.1} parent=1 // pred_region
      %53 = dma.done [#allocation3], 128
    $region25: #{tpu_custom_call.1} parent=1 // pred_fallthru
      _
    // Predicated region
    $region26: #{tpu_custom_call.1} parent=1 // pred_check
      _
    $region27: #{tpu_custom_call.1} parent=1 // pred_check_branch
      %55 = sbr.rel (0) target = $region29
    $region28: #{tpu_custom_call.1} parent=1 // pred_region
      %56 = dma.done [#allocation6], 512
    $region29: #{tpu_custom_call.1} parent=1 // pred_fallthru
      _
    // Predicated region
    $region30: #{tpu_custom_call.1} parent=1 // pred_check
      _
    $region31: #{tpu_custom_call.1} parent=1 // pred_check_branch
      %58 = sbr.rel (0) target = $region33
    $region32: #{tpu_custom_call.1} parent=1 // pred_region
      %59 = dma.done [#allocation6], 512
    $region33: #{tpu_custom_call.1} parent=1 // pred_fallthru
      _
    %v60 = vld [vmem:[#allocation2] sm:$0xff]
    %v61 = vld [vmem:[#allocation5] sm:$0xff]
    %v62 = vld [vmem:[#allocation5 + $0x8] sm:$0xff]
    %v63 = vld [vmem:[#allocation5 + $0x10] sm:$0xff]
    %v64 = vld [vmem:[#allocation5 + $0x18] sm:$0xff]
    %v65 = vld [vmem:[%s2] sm:$0x1]
    %v67 = vlaneseq
    %v68 = vshrl.u32 %v67, 7
    %v69 = vsub.s32 0, %v68
    %v70 = vrot.slane %v65, %v69
    %vm72 = vcmask 261120
    %v74 = vsel %vm72, %v60, 0
    %76 = vmatprep.subr.mxu0 0.0
    %77 = vmatpush1.msra.mxu0 0.0
    %78 = vmatprep.subr.mxu0 0.0
    %79 = vmatpush1.msra.mxu0 0.0
    %80 = vmatprep.subr.mxu0 0.0
    %81 = vmatpush1.msra.mxu0 0.0
    %82 = vmatprep.subr.mxu0 0.0
    %83 = vmatpush1.msra.mxu0 0.0
    %84 = vmatprep.subr.mxu0 0.0
    %85 = vmatpush1.msra.mxu0 0.0
    %86 = vmatprep.subr.mxu0 0.0
    %87 = vmatpush1.msra.mxu0 0.0
    %88 = vmatprep.subr.mxu0 0.0
    %89 = vmatpush1.msra.mxu0 0.0
    %90 = vmatprep.subr.mxu0 0.0
    %91 = vmatpush1.msra.mxu0 0.0
    %92 = vmatprep.subr.mxu0 0.0
    %93 = vmatpush1.msra.mxu0 0.0
    %94 = vmatprep.subr.mxu0 0.0
    %95 = vmatpush1.msra.mxu0 0.0
    %96 = vmatprep.subr.mxu0 0.0
    %97 = vmatpush1.msra.mxu0 0.0
    %98 = vmatprep.subr.mxu0 0.0
    %99 = vmatpush1.msra.mxu0 0.0
    %100 = vmatprep.subr.mxu0 0.0
    %101 = vmatpush1.msra.mxu0 %v64
    %102 = vmatprep.subr.mxu0 0.0
    %103 = vmatpush1.msra.mxu0 %v63
    %104 = vmatprep.subr.mxu0 0.0
    %105 = vmatpush1.msra.mxu0 %v62
    %106 = vmatprep.subr.mxu0 0.0
    %107 = vmatpush1.msra.mxu0 %v61
    %108 = vmatprep.subr.mxu0 0.0
    %109 = vmatpush2.msra.mxu0 0.0
    %110 = vmatprep.subr.mxu0 0.0
    %111 = vmatpush2.msra.mxu0 0.0
    %112 = vmatprep.subr.mxu0 0.0
    %113 = vmatpush2.msra.mxu0 0.0
    %114 = vmatprep.subr.mxu0 0.0
    %115 = vmatpush2.msra.mxu0 0.0
    %116 = vmatprep.subr.mxu0 0.0
    %117 = vmatpush2.msra.mxu0 0.0
    %118 = vmatprep.subr.mxu0 0.0
    %119 = vmatpush2.msra.mxu0 0.0
    %120 = vmatprep.subr.mxu0 0.0
    %121 = vmatpush2.msra.mxu0 0.0
    %122 = vmatprep.subr.mxu0 0.0
    %123 = vmatpush2.msra.mxu0 0.0
    %124 = vmatprep.subr.mxu0 0.0
    %125 = vmatpush2.msra.mxu0 0.0
    %126 = vmatprep.subr.mxu0 0.0
    %127 = vmatpush2.msra.mxu0 0.0
    %128 = vmatprep.subr.mxu0 0.0
    %129 = vmatpush2.msra.mxu0 0.0
    %130 = vmatprep.subr.mxu0 0.0
    %131 = vmatpush2.msra.mxu0 0.0
    %132 = vmatprep.subr.mxu0 0.0
    %133 = vmatpush2.msra.mxu0 0.0
    %134 = vmatprep.subr.mxu0 0.0
    %135 = vmatpush2.msra.mxu0 0.0
    %136 = vmatprep.subr.mxu0 0.0
    %137 = vmatpush2.msra.mxu0 0.0
    %138 = vmatprep.subr.mxu0 0.0
    %139 = vmatpush2.msra.mxu0 0.0
    %140 = vmatprep.mubr.f32.mxu0 0.0
    %141 = vmatmul.mubr.f32.gmra.mxu0 %v74
    %v142 = vpop.f32.mrf.mxu0
    %v143 = vadd.f32 %v70, %v142
    %v144 = vpop.f32.mrf.mxu0
    %145 = vdwg.mxu0
    %v146 = vtanh.pop %v143
    %v147 = vld [vmem:[#allocation7] sm:$0xff]
    %v148 = vld [vmem:[#allocation7 + $0x8] sm:$0xff]
    %v149 = vld [vmem:[#allocation7 + $0x10] sm:$0xff]
    %v150 = vld [vmem:[#allocation7 + $0x18] sm:$0xff]
    %v151 = vld [vmem:[%s4] sm:$0x1]
    %v153 = vlaneseq
    %v154 = vshrl.u32 %v153, 7
    %v155 = vsub.s32 0, %v154
    %v156 = vrot.slane %v151, %v155
    %v159 = vsel %vm72, %v146, 0
    %161 = vmatprep.subr.mxu0 0.0
    %162 = vmatpush1.msra.mxu0 0.0
    %163 = vmatprep.subr.mxu0 0.0
    %164 = vmatpush1.msra.mxu0 0.0
    %165 = vmatprep.subr.mxu0 0.0
    %166 = vmatpush1.msra.mxu0 0.0
    %167 = vmatprep.subr.mxu0 0.0
    %168 = vmatpush1.msra.mxu0 0.0
    %169 = vmatprep.subr.mxu0 0.0
    %170 = vmatpush1.msra.mxu0 0.0
    %171 = vmatprep.subr.mxu0 0.0
    %172 = vmatpush1.msra.mxu0 0.0
    %173 = vmatprep.subr.mxu0 0.0
    %174 = vmatpush1.msra.mxu0 0.0
    %175 = vmatprep.subr.mxu0 0.0
    %176 = vmatpush1.msra.mxu0 0.0
    %177 = vmatprep.subr.mxu0 0.0
    %178 = vmatpush1.msra.mxu0 0.0
    %179 = vmatprep.subr.mxu0 0.0
    %180 = vmatpush1.msra.mxu0 0.0
    %181 = vmatprep.subr.mxu0 0.0
    %182 = vmatpush1.msra.mxu0 0.0
    %183 = vmatprep.subr.mxu0 0.0
    %184 = vmatpush1.msra.mxu0 0.0
    %185 = vmatprep.subr.mxu0 0.0
    %186 = vmatpush1.msra.mxu0 %v150
    %187 = vmatprep.subr.mxu0 0.0
    %188 = vmatpush1.msra.mxu0 %v149
    %189 = vmatprep.subr.mxu0 0.0
    %190 = vmatpush1.msra.mxu0 %v148
    %191 = vmatprep.subr.mxu0 0.0
    %192 = vmatpush1.msra.mxu0 %v147
    %193 = vmatprep.subr.mxu0 0.0
    %194 = vmatpush2.msra.mxu0 0.0
    %195 = vmatprep.subr.mxu0 0.0
    %196 = vmatpush2.msra.mxu0 0.0
    %197 = vmatprep.subr.mxu0 0.0
    %198 = vmatpush2.msra.mxu0 0.0
    %199 = vmatprep.subr.mxu0 0.0
    %200 = vmatpush2.msra.mxu0 0.0
    %201 = vmatprep.subr.mxu0 0.0
    %202 = vmatpush2.msra.mxu0 0.0
    %203 = vmatprep.subr.mxu0 0.0
    %204 = vmatpush2.msra.mxu0 0.0
    %205 = vmatprep.subr.mxu0 0.0
    %206 = vmatpush2.msra.mxu0 0.0
    %207 = vmatprep.subr.mxu0 0.0
    %208 = vmatpush2.msra.mxu0 0.0
    %209 = vmatprep.subr.mxu0 0.0
    %210 = vmatpush2.msra.mxu0 0.0
    %211 = vmatprep.subr.mxu0 0.0
    %212 = vmatpush2.msra.mxu0 0.0
    %213 = vmatprep.subr.mxu0 0.0
    %214 = vmatpush2.msra.mxu0 0.0
    %215 = vmatprep.subr.mxu0 0.0
    %216 = vmatpush2.msra.mxu0 0.0
    %217 = vmatprep.subr.mxu0 0.0
    %218 = vmatpush2.msra.mxu0 0.0
    %219 = vmatprep.subr.mxu0 0.0
    %220 = vmatpush2.msra.mxu0 0.0
    %221 = vmatprep.subr.mxu0 0.0
    %222 = vmatpush2.msra.mxu0 0.0
    %223 = vmatprep.subr.mxu0 0.0
    %224 = vmatpush2.msra.mxu0 0.0
    %225 = vmatprep.mubr.f32.mxu0 0.0
    %226 = vmatmul.mubr.f32.gmra.mxu0 %v159
    %v227 = vpop.f32.mrf.mxu0
    %v228 = vadd.f32 %v156, %v227
    %v229 = vpop.f32.mrf.mxu0
    %230 = vdwg.mxu0
    %231 = vst [vmem:[#allocation8] sm:$0xff] %v228
    // Predicated region
    $region34: #{tpu_custom_call.1} parent=1 // pred_check
      _
    $region35: #{tpu_custom_call.1} parent=1 // pred_check_branch
      %233 = sbr.rel (0) target = $region37
    $region36: #{tpu_custom_call.1} parent=1 // pred_region
      %s235 = ssub.s32 128, 128
      %236 = vsyncadd [#allocation4], %s235
      %s238 = sshll.u32 [#allocation8], 4
      %s239 = int_to_ptr.vmem [resolvable:$true] %s238
      %241 = dma.vmem_to_hbm [thread:$0]  %s239, 128, %s5, [#allocation4]
    $region37: #{tpu_custom_call.1} parent=1 // pred_fallthru
      _
    // Predicated region
    $region38: #{tpu_custom_call.1} parent=1 // pred_check
      _
    $region39: #{tpu_custom_call.1} parent=1 // pred_check_branch
      %243 = sbr.rel (0) target = $region41
    $region40: #{tpu_custom_call.1} parent=1 // pred_region
      %244 = dma.done [#allocation4], 128
    $region41: #{tpu_custom_call.1} parent=1 // pred_fallthru
      _
    %245 = vsyncpa [#allocation3], 1
    %246 = vsyncpa [#allocation6], 1
    %247 = vsyncpa [#allocation4], 1

// kernel: tpu_custom_call.1
$region0: #{tpu_custom_call.1}
  #allocation0 [shape = 'u32[]', space=smem, size = 0x4, offset = 0x4, fixed_abs, tag = 'smem constant byte address 0x4 - core index']
  #allocation1 [shape = 'u32[144,128]{1,0:T(1,128)}', space=vmem, size = 0x12000, scoped, tag = 'internal scratch']
  %s0 = inlined_call_operand.hbm [shape: f32[8,32], index: 0, kind: input, shape index: {}]
  %s1 = inlined_call_operand.hbm [shape: f32[32,32], index: 1, kind: input, shape index: {}]
  %s2 = inlined_call_operand.vmem [shape: f32[1,32], index: 2, kind: input, shape index: {}]
  %s3 = inlined_call_operand.hbm [shape: f32[32,128], index: 3, kind: input, shape index: {}]
  %s4 = inlined_call_operand.vmem [shape: f32[1,128], index: 4, kind: input, shape index: {}]
  %s5 = inlined_call_operand.hbm [shape: f32[8,128], index: 5, kind: output, shape index: {}]
  %s6 = sld [smem:[#allocation0]]
  $region42: #{tpu_custom_call.1} parent=0
    _
  %s8 = ssub.s32 1, %s6
  %s9 = scalar_select 0, %s8, %s6
  $region1: #{tpu_custom_call.1} parent=0
    #allocation2 [shape = 'u8[4096]{0}', space=vmem, size = 0x1000, scoped, tag = 'input window, operand 0, single buffered']
    #allocation3 [shape = 's32[1]{0}', space=sflag, size = 0x4, scoped, tag = 'scoped memory for tpu_custom_call.1']
    #allocation4 [shape = 's32[1]{0}', space=sflag, size = 0x4, scoped, tag = 'scoped memory for tpu_custom_call.1']
    #allocation5 [shape = 'u8[16384]{0}', space=vmem, size = 0x4000, scoped, tag = 'input window, operand 1, single buffered']
    #allocation6 [shape = 's32[1]{0}', space=sflag, size = 0x4, scoped, tag = 'scoped memory for tpu_custom_call.1']
    #allocation7 [shape = 'u8[16384]{0}', space=vmem, size = 0x4000, scoped, tag = 'input window, operand 3, single buffered']
    #allocation8 [shape = 'u8[4096]{0}', space=vmem, size = 0x1000, scoped, tag = 'output window, operand 0, single buffered']
    %10 = vsyncpa [#allocation3], 0
    %11 = vsyncpa [#allocation6], 0
    %12 = vsyncpa [#allocation4], 0
    // Predicated region
    $region2: #{tpu_custom_call.1} parent=1 // pred_check
      _
    $region3: #{tpu_custom_call.1} parent=1 // pred_check_branch
      %14 = sbr.rel (0) target = $region5
    $region4: #{tpu_custom_call.1} parent=1 // pred_region
      %s16 = ssub.s32 128, 128
      %17 = vsyncadd [#allocation3], %s16
      %s19 = sshll.u32 [#allocation2], 4
      %s20 = int_to_ptr.vmem [resolvable:$true] %s19
      %22 = dma.hbm_to_vmem [thread:$0]  %s0, 128, %s20, [#allocation3]
    $region5: #{tpu_custom_call.1} parent=1 // pred_fallthru
      _
    // Predicated region
    $region6: #{tpu_custom_call.1} parent=1 // pred_check
      _
    $region7: #{tpu_custom_call.1} parent=1 // pred_check_branch
      %24 = sbr.rel (0) target = $region9
    $region8: #{tpu_custom_call.1} parent=1 // pred_region
      %s26 = ssub.s32 512, 512
      %27 = vsyncadd [#allocation6], %s26
      %s28 = sshll.u32 [#allocation5], 4
      %s29 = int_to_ptr.vmem [resolvable:$true] %s28
      %34 = dma.hbm_to_vmem [thread:$0]  %s1, 512, %s29, [#allocation6], 128, 128, 8
    $region9: #{tpu_custom_call.1} parent=1 // pred_fallthru
      _
    // Predicated region
    $region10: #{tpu_custom_call.1} parent=1 // pred_check
      _
    $region11: #{tpu_custom_call.1} parent=1 // pred_check_branch
      %36 = sbr.rel (0) target = $region13
    $region12: #{tpu_custom_call.1} parent=1 // pred_region
      _
    $region13: #{tpu_custom_call.1} parent=1 // pred_fallthru
      _
    // Predicated region
    $region14: #{tpu_custom_call.1} parent=1 // pred_check
      _
    $region15: #{tpu_custom_call.1} parent=1 // pred_check_branch
      %38 = sbr.rel (0) target = $region17
    $region16: #{tpu_custom_call.1} parent=1 // pred_region
      %s40 = ssub.s32 512, 512
      %41 = vsyncadd [#allocation6], %s40
      %s42 = sshll.u32 [#allocation7], 4
      %s43 = int_to_ptr.vmem [resolvable:$true] %s42
      %48 = dma.hbm_to_vmem [thread:$0]  %s3, 512, %s43, [#allocation6], 128, 128, 8
    $region17: #{tpu_custom_call.1} parent=1 // pred_fallthru
      _
    // Predicated region
    $region18: #{tpu_custom_call.1} parent=1 // pred_check
      _
    $region19: #{tpu_custom_call.1} parent=1 // pred_check_branch
      %50 = sbr.rel (0) target = $region21
    $region20: #{tpu_custom_call.1} parent=1 // pred_region
      _
    $region21: #{tpu_custom_call.1} parent=1 // pred_fallthru
      _
    // Predicated region
    $region22: #{tpu_custom_call.1} parent=1 // pred_check
      _
    $region23: #{tpu_custom_call.1} parent=1 // pred_check_branch
      %52 = sbr.rel (0) target = $region25
    $region24: #{tpu_custom_call.1} parent=1 // pred_region
      %53 = dma.done [#allocation3], 128
    $region25: #{tpu_custom_call.1} parent=1 // pred_fallthru
      _
    // Predicated region
    $region26: #{tpu_custom_call.1} parent=1 // pred_check
      _
    $region27: #{tpu_custom_call.1} parent=1 // pred_check_branch
      %55 = sbr.rel (0) target = $region29
    $region28: #{tpu_custom_call.1} parent=1 // pred_region
      %56 = dma.done [#allocation6], 512
    $region29: #{tpu_custom_call.1} parent=1 // pred_fallthru
      _
    // Predicated region
    $region30: #{tpu_custom_call.1} parent=1 // pred_check
      _
    $region31: #{tpu_custom_call.1} parent=1 // pred_check_branch
      %58 = sbr.rel (0) target = $region33
    $region32: #{tpu_custom_call.1} parent=1 // pred_region
      %59 = dma.done [#allocation6], 512
    $region33: #{tpu_custom_call.1} parent=1 // pred_fallthru
      _
    %v60 = vld [vmem:[#allocation2] sm:$0xff]
    %v61 = vld [vmem:[#allocation5] sm:$0xff]
    %v62 = vld [vmem:[#allocation5 + $0x8] sm:$0xff]
    %v63 = vld [vmem:[#allocation5 + $0x10] sm:$0xff]
    %v64 = vld [vmem:[#allocation5 + $0x18] sm:$0xff]
    %v65 = vld [vmem:[%s2] sm:$0x1]
    %v67 = vlaneseq
    %v68 = vshrl.u32 %v67, 7
    %v69 = vsub.s32 0, %v68
    %v70 = vrot.slane %v65, %v69
    %vm72 = vcmask 261120
    %v74 = vsel %vm72, %v60, 0
    %76 = vmatprep.subr.mxu0 0.0
    %77 = vmatpush1.msra.mxu0 0.0
    %78 = vmatprep.subr.mxu0 0.0
    %79 = vmatpush1.msra.mxu0 0.0
    %80 = vmatprep.subr.mxu0 0.0
    %81 = vmatpush1.msra.mxu0 0.0
    %82 = vmatprep.subr.mxu0 0.0
    %83 = vmatpush1.msra.mxu0 0.0
    %84 = vmatprep.subr.mxu0 0.0
    %85 = vmatpush1.msra.mxu0 0.0
    %86 = vmatprep.subr.mxu0 0.0
    %87 = vmatpush1.msra.mxu0 0.0
    %88 = vmatprep.subr.mxu0 0.0
    %89 = vmatpush1.msra.mxu0 0.0
    %90 = vmatprep.subr.mxu0 0.0
    %91 = vmatpush1.msra.mxu0 0.0
    %92 = vmatprep.subr.mxu0 0.0
    %93 = vmatpush1.msra.mxu0 0.0
    %94 = vmatprep.subr.mxu0 0.0
    %95 = vmatpush1.msra.mxu0 0.0
    %96 = vmatprep.subr.mxu0 0.0
    %97 = vmatpush1.msra.mxu0 0.0
    %98 = vmatprep.subr.mxu0 0.0
    %99 = vmatpush1.msra.mxu0 0.0
    %100 = vmatprep.subr.mxu0 0.0
    %101 = vmatpush1.msra.mxu0 %v64
    %102 = vmatprep.subr.mxu0 0.0
    %103 = vmatpush1.msra.mxu0 %v63
    %104 = vmatprep.subr.mxu0 0.0
    %105 = vmatpush1.msra.mxu0 %v62
    %106 = vmatprep.subr.mxu0 0.0
    %107 = vmatpush1.msra.mxu0 %v61
    %108 = vmatprep.subr.mxu0 0.0
    %109 = vmatpush2.msra.mxu0 0.0
    %110 = vmatprep.subr.mxu0 0.0
    %111 = vmatpush2.msra.mxu0 0.0
    %112 = vmatprep.subr.mxu0 0.0
    %113 = vmatpush2.msra.mxu0 0.0
    %114 = vmatprep.subr.mxu0 0.0
    %115 = vmatpush2.msra.mxu0 0.0
    %116 = vmatprep.subr.mxu0 0.0
    %117 = vmatpush2.msra.mxu0 0.0
    %118 = vmatprep.subr.mxu0 0.0
    %119 = vmatpush2.msra.mxu0 0.0
    %120 = vmatprep.subr.mxu0 0.0
    %121 = vmatpush2.msra.mxu0 0.0
    %122 = vmatprep.subr.mxu0 0.0
    %123 = vmatpush2.msra.mxu0 0.0
    %124 = vmatprep.subr.mxu0 0.0
    %125 = vmatpush2.msra.mxu0 0.0
    %126 = vmatprep.subr.mxu0 0.0
    %127 = vmatpush2.msra.mxu0 0.0
    %128 = vmatprep.subr.mxu0 0.0
    %129 = vmatpush2.msra.mxu0 0.0
    %130 = vmatprep.subr.mxu0 0.0
    %131 = vmatpush2.msra.mxu0 0.0
    %132 = vmatprep.subr.mxu0 0.0
    %133 = vmatpush2.msra.mxu0 0.0
    %134 = vmatprep.subr.mxu0 0.0
    %135 = vmatpush2.msra.mxu0 0.0
    %136 = vmatprep.subr.mxu0 0.0
    %137 = vmatpush2.msra.mxu0 0.0
    %138 = vmatprep.subr.mxu0 0.0
    %139 = vmatpush2.msra.mxu0 0.0
    %140 = vmatprep.mubr.f32.mxu0 0.0
    %141 = vmatmul.mubr.f32.gmra.mxu0 %v74
    %v142 = vpop.f32.mrf.mxu0
    %v143 = vadd.f32 %v70, %v142
    %v144 = vpop.f32.mrf.mxu0
    %145 = vdwg.mxu0
    %v146 = vtanh.pop %v143
    %v147 = vld [vmem:[#allocation7] sm:$0xff]
    %v148 = vld [vmem:[#allocation7 + $0x8] sm:$0xff]
    %v149 = vld [vmem:[#allocation7 + $0x10] sm:$0xff]
    %v150 = vld [vmem:[#allocation7 + $0x18] sm:$0xff]
    %v151 = vld [vmem:[%s4] sm:$0x1]
    %v153 = vlaneseq
    %v154 = vshrl.u32 %v153, 7
    %v155 = vsub.s32 0, %v154
    %v156 = vrot.slane %v151, %v155
    %v159 = vsel %vm72, %v146, 0
    %161 = vmatprep.subr.mxu0 0.0
    %162 = vmatpush1.msra.mxu0 0.0
    %163 = vmatprep.subr.mxu0 0.0
    %164 = vmatpush1.msra.mxu0 0.0
    %165 = vmatprep.subr.mxu0 0.0
    %166 = vmatpush1.msra.mxu0 0.0
    %167 = vmatprep.subr.mxu0 0.0
    %168 = vmatpush1.msra.mxu0 0.0
    %169 = vmatprep.subr.mxu0 0.0
    %170 = vmatpush1.msra.mxu0 0.0
    %171 = vmatprep.subr.mxu0 0.0
    %172 = vmatpush1.msra.mxu0 0.0
    %173 = vmatprep.subr.mxu0 0.0
    %174 = vmatpush1.msra.mxu0 0.0
    %175 = vmatprep.subr.mxu0 0.0
    %176 = vmatpush1.msra.mxu0 0.0
    %177 = vmatprep.subr.mxu0 0.0
    %178 = vmatpush1.msra.mxu0 0.0
    %179 = vmatprep.subr.mxu0 0.0
    %180 = vmatpush1.msra.mxu0 0.0
    %181 = vmatprep.subr.mxu0 0.0
    %182 = vmatpush1.msra.mxu0 0.0
    %183 = vmatprep.subr.mxu0 0.0
    %184 = vmatpush1.msra.mxu0 0.0
    %185 = vmatprep.subr.mxu0 0.0
    %186 = vmatpush1.msra.mxu0 %v150
    %187 = vmatprep.subr.mxu0 0.0
    %188 = vmatpush1.msra.mxu0 %v149
    %189 = vmatprep.subr.mxu0 0.0
    %190 = vmatpush1.msra.mxu0 %v148
    %191 = vmatprep.subr.mxu0 0.0
    %192 = vmatpush1.msra.mxu0 %v147
    %193 = vmatprep.subr.mxu0 0.0
    %194 = vmatpush2.msra.mxu0 0.0
    %195 = vmatprep.subr.mxu0 0.0
    %196 = vmatpush2.msra.mxu0 0.0
    %197 = vmatprep.subr.mxu0 0.0
    %198 = vmatpush2.msra.mxu0 0.0
    %199 = vmatprep.subr.mxu0 0.0
    %200 = vmatpush2.msra.mxu0 0.0
    %201 = vmatprep.subr.mxu0 0.0
    %202 = vmatpush2.msra.mxu0 0.0
    %203 = vmatprep.subr.mxu0 0.0
    %204 = vmatpush2.msra.mxu0 0.0
    %205 = vmatprep.subr.mxu0 0.0
    %206 = vmatpush2.msra.mxu0 0.0
    %207 = vmatprep.subr.mxu0 0.0
    %208 = vmatpush2.msra.mxu0 0.0
    %209 = vmatprep.subr.mxu0 0.0
    %210 = vmatpush2.msra.mxu0 0.0
    %211 = vmatprep.subr.mxu0 0.0
    %212 = vmatpush2.msra.mxu0 0.0
    %213 = vmatprep.subr.mxu0 0.0
    %214 = vmatpush2.msra.mxu0 0.0
    %215 = vmatprep.subr.mxu0 0.0
    %216 = vmatpush2.msra.mxu0 0.0
    %217 = vmatprep.subr.mxu0 0.0
    %218 = vmatpush2.msra.mxu0 0.0
    %219 = vmatprep.subr.mxu0 0.0
    %220 = vmatpush2.msra.mxu0 0.0
    %221 = vmatprep.subr.mxu0 0.0
    %222 = vmatpush2.msra.mxu0 0.0
    %223 = vmatprep.subr.mxu0 0.0
    %224 = vmatpush2.msra.mxu0 0.0
    %225 = vmatprep.mubr.f32.mxu0 0.0
    %226 = vmatmul.mubr.f32.gmra.mxu0 %v159
    %v227 = vpop.f32.mrf.mxu0
    %v228 = vadd.f32 %v156, %v227
    %v229 = vpop.f32.mrf.mxu0
    %230 = vdwg.mxu0
    %231 = vst [vmem:[#allocation8] sm:$0xff] %v228
    // Predicated region
    $region34: #{tpu_custom_call.1} parent=1 // pred_check
      _
    $region35: #{tpu_custom_call.1} parent=1 // pred_check_branch
      %233 = sbr.rel (0) target = $region37
    $region36: #{tpu_custom_call.1} parent=1 // pred_region
      %s235 = ssub.s32 128, 128
      %236 = vsyncadd [#allocation4], %s235
      %s238 = sshll.u32 [#allocation8], 4
      %s239 = int_to_ptr.vmem [resolvable:$true] %s238
      %241 = dma.vmem_to_hbm [thread:$0]  %s239, 128, %s5, [#allocation4]
    $region37: #{tpu_custom_call.1} parent=1 // pred_fallthru
      _
    // Predicated region
    $region38: #{tpu_custom_call.1} parent=1 // pred_check
      _
    $region39: #{tpu_custom_call.1} parent=1 // pred_check_branch
      %243 = sbr.rel (0) target = $region41
    $region40: #{tpu_custom_call.1} parent=1 // pred_region
      %244 = dma.done [#allocation4], 128
    $region41: #{tpu_custom_call.1} parent=1 // pred_fallthru
      _
    %245 = vsyncpa [#allocation3], 1
    %246 = vsyncpa [#allocation6], 1
    %247 = vsyncpa [#allocation4], 1

</llo_original>
